<compile_context>
chip_gen: v6e
topology: v6e:2x2x1
jax: 0.10.0
libtpu: 0.0.40
codegen_flags: <defaults>
</compile_context>

<pallas_src>
import functools

import jax
import jax.numpy as jnp
from jax import lax
from jax.experimental import pallas as pl
from jax.experimental.pallas import tpu as pltpu


def _siamese_metric_kernel(x_ref, w1_ref, b1_ref, w2_ref, b2_ref, o_ref,
                           acc_ref, *, inv_hw):
    # x_ref  : (Nb, 256, THW)   batch block x spatial chunk (lanes = H*W)
    # acc_ref: (Nb, 256, 128)   f32 elementwise (VPU-only) GAP accumulator
    # o_ref  : (1, Nb, 64)      written once, at the last spatial step
    j = pl.program_id(1)

    @pl.when(j == 0)
    def _():
        acc_ref[...] = jnp.zeros_like(acc_ref)

    thw = x_ref.shape[-1]
    nfull = thw // 128
    rem = thw % 128

    # Elementwise accumulation of 128-lane sub-chunks (no per-chunk cross-lane
    # reduce).  unroll capped at 4 to bound live vreg ranges.
    if nfull > 0:
        def body(s, carry):
            start = pl.multiple_of(s * 128, 128)
            acc_ref[...] += x_ref[:, :, pl.ds(start, 128)].astype(jnp.float32)
            return carry

        lax.fori_loop(0, nfull, body, 0, unroll=min(4, nfull))

    if rem > 0:
        # hw not a multiple of 128: fold the remainder lanes into lanes
        # [0, rem) of the accumulator (never touches padding lanes).
        acc_ref[:, :, :rem] += (
            x_ref[:, :, pl.ds(nfull * 128, rem)].astype(jnp.float32))

    # Finalize: one cross-lane reduce + MLP head, once per batch block.
    @pl.when(j == pl.num_programs(1) - 1)
    def _():
        gap = jnp.sum(acc_ref[...], axis=-1) * inv_hw            # (Nb, 256) f32
        h = jnp.dot(gap, w1_ref[...].astype(jnp.float32),
                    preferred_element_type=jnp.float32)
        h = jnp.maximum(h + b1_ref[...].astype(jnp.float32), 0.0)
        out = jnp.dot(h, w2_ref[...].astype(jnp.float32),
                      preferred_element_type=jnp.float32)
        out = out + b2_ref[...].astype(jnp.float32)              # (Nb, 64)
        o_ref[...] = out[None, :, :].astype(o_ref.dtype)


def _hw_budgets():
    """(feature-tile target bytes, vmem_limit_bytes) per TPU generation."""
    try:
        vmem_cap = pltpu.get_tpu_info().vmem_capacity_bytes
    except Exception:
        vmem_cap = 64 * 1024 * 1024          # conservative (v7x-class) default
    if vmem_cap >= 100 * 1024 * 1024:        # v5e / v6e: 128 MiB VMEM
        return 8 * 1024 * 1024, 64 * 1024 * 1024
    # v7x-class: 64 MiB physical VMEM -> smaller tiles, modest scoped limit
    return 4 * 1024 * 1024, 40 * 1024 * 1024


def _pick_batch_block(n):
    """Largest of {8,4,2} dividing n while keeping >= 2 steps on the parallel
    batch axis (v7x megacore); otherwise fall back to Nb=1."""
    for nb in (8, 4, 2):
        if n % nb == 0 and n // nb >= 2:
            return nb
    return 1


def _pick_spatial_tile(hw, nb, itemsize, target_bytes):
    """Largest spatial tile that is a multiple of 128, divides hw, and keeps
    an (nb, 256, thw) feature tile near target_bytes (Pallas double-buffers)."""
    if hw % 128 != 0:
        return hw                 # full-extent block (exempt from lane rule)
    cap = max(128, target_bytes // (nb * 256 * itemsize))
    cap -= cap % 128
    cap = max(cap, 128)
    t = min(hw, cap)
    while hw % t != 0:
        t -= 128
    return t


def siamese_metric_net(feature_nchw, w1, b1, w2, b2):
    """feature_nchw: (N, C, H, W) with C == 256.  Returns (N, 64)."""
    n, c, h, w = feature_nchw.shape
    assert c == 256, "SiameseMetricNet expects 256 input channels"
    hw = h * w

    # Free, contiguous reshape (no HBM transpose): NCHW -> (N, C, H*W).
    x = feature_nchw.reshape(n, c, hw)

    nb = _pick_batch_block(n)
    target_tile_bytes, vmem_limit = _hw_budgets()
    thw = _pick_spatial_tile(hw, nb, x.dtype.itemsize, target_tile_bytes)
    grid = (n // nb, hw // thw)

    kernel = functools.partial(_siamese_metric_kernel, inv_hw=1.0 / float(hw))

    flops = n * (2 * 256 * 128 + 2 * 128 * 64) + n * 256 * hw
    bytes_accessed = (
        x.size * x.dtype.itemsize
        + w1.size * w1.dtype.itemsize + b1.size * b1.dtype.itemsize
        + w2.size * w2.dtype.itemsize + b2.size * b2.dtype.itemsize
        + n * 64 * x.dtype.itemsize)

    out = pl.pallas_call(
        kernel,
        out_shape=jax.ShapeDtypeStruct((n // nb, nb, 64), feature_nchw.dtype),
        grid_spec=pltpu.PrefetchScalarGridSpec(
            num_scalar_prefetch=0,
            grid=grid,
            in_specs=[
                pl.BlockSpec((nb, c, thw), lambda i, j: (i, 0, j)),  # feature
                pl.BlockSpec((256, 128), lambda i, j: (0, 0)),       # w1 (resident)
                pl.BlockSpec((1, 128), lambda i, j: (0, 0)),         # b1
                pl.BlockSpec((128, 64), lambda i, j: (0, 0)),        # w2
                pl.BlockSpec((1, 64), lambda i, j: (0, 0)),          # b2
            ],
            out_specs=pl.BlockSpec((1, nb, 64), lambda i, j: (i, 0, 0)),
            scratch_shapes=[pltpu.VMEM((nb, 256, 128), jnp.float32)],
        ),
        compiler_params=pltpu.CompilerParams(
            dimension_semantics=("parallel", "arbitrary"),
            vmem_limit_bytes=vmem_limit,
        ),
        cost_estimate=pl.CostEstimate(
            flops=flops, transcendentals=0, bytes_accessed=bytes_accessed),
    )(x, w1, b1, w2, b2)
    return out.reshape(n, 64)


def init_params(key, dtype=jnp.float32):
    """Deterministic synthetic parameters matching nn.Linear shapes.

    PyTorch Linear stores W as (out, in); we store the transposed (in, out)
    layout so the kernel computes x @ W + b directly.
    """
    k1, k2, k3, k4 = jax.random.split(key, 4)
    w1 = jax.random.normal(k1, (256, 128), dtype) * 0.05   # (in, out)
    b1 = jax.random.normal(k2, (1, 128), dtype) * 0.01
    w2 = jax.random.normal(k3, (128, 64), dtype) * 0.05
    b2 = jax.random.normal(k4, (1, 64), dtype) * 0.01
    return w1, b1, w2, b2


if __name__ == "__main__":
    key = jax.random.PRNGKey(0)
    kx, kp = jax.random.split(key)

    # Small shapes consistent with the module: batch=2, channels=256 (required
    # by Linear(256, ...)), spatial 16x16.
    feature = jax.random.normal(kx, (2, 256, 16, 16), jnp.float32)
    w1, b1, w2, b2 = init_params(kp)

    out = siamese_metric_net(feature, w1, b1, w2, b2)
    out = jax.block_until_ready(out)

    # Pure-JAX reference for a sanity check.
    gap_ref = jnp.mean(feature, axis=(2, 3))                      # (N, 256)
    h_ref = jnp.maximum(gap_ref @ w1 + b1, 0.0)                   # (N, 128)
    ref = h_ref @ w2 + b2                                         # (N, 64)
    assert out.shape == (2, 64)
    assert jnp.allclose(out, ref, atol=1e-4, rtol=1e-4)

    print("KERNEL_OK")
</pallas_src>

<mosaic_0001>
module attributes {stable_mosaic.version = 11 : i64} {
  func.func @_siamese_metric_kernel(%arg0: i32, %arg1: i32, %arg2: memref<1x256x256xf32, #tpu.memory_space<vmem>>, %arg3: memref<256x128xf32, #tpu.memory_space<vmem>>, %arg4: memref<1x128xf32, #tpu.memory_space<vmem>>, %arg5: memref<128x64xf32, #tpu.memory_space<vmem>>, %arg6: memref<1x64xf32, #tpu.memory_space<vmem>>, %arg7: memref<1x1x64xf32, #tpu.memory_space<vmem>>, %arg8: memref<1x256x128xf32, #tpu.memory_space<vmem>>) attributes {dimension_semantics = [#tpu.dimension_semantics<parallel>, #tpu.dimension_semantics<arbitrary>], iteration_bounds = array<i64: 2, 1>, scalar_prefetch = 0 : i64, scratch_operands = 1 : i64, tpu.core_type = #tpu.core_type<tc>, window_params = [{transform_indices = @transform_0, window_bounds = array<i64: 1, 256, 256>}, {pipeline_mode = #tpu.pipeline_mode<synchronous>, transform_indices = @transform_1, window_bounds = array<i64: 256, 128>}, {pipeline_mode = #tpu.pipeline_mode<synchronous>, transform_indices = @transform_2, window_bounds = array<i64: 1, 128>}, {pipeline_mode = #tpu.pipeline_mode<synchronous>, transform_indices = @transform_3, window_bounds = array<i64: 128, 64>}, {pipeline_mode = #tpu.pipeline_mode<synchronous>, transform_indices = @transform_4, window_bounds = array<i64: 1, 64>}, {transform_indices = @transform_5, window_bounds = array<i64: 1, 1, 64>}]} {
    %c0_i32 = arith.constant 0 : i32
    %0 = arith.cmpi eq, %arg1, %c0_i32 : i32
    %1 = arith.extui %0 : i1 to i32
    %c0_i32_0 = arith.constant 0 : i32
    %2 = arith.cmpi ne, %1, %c0_i32_0 : i32
    scf.if %2 {
      %cst = arith.constant 0.000000e+00 : f32
      %20 = vector.broadcast %cst : f32 to vector<1x256x128xf32>
      %c0_20 = arith.constant 0 : index
      %c0_21 = arith.constant 0 : index
      %c0_22 = arith.constant 0 : index
      %21 = vector.load %arg8[%c0_20, %c0_21, %c0_22] : memref<1x256x128xf32, #tpu.memory_space<vmem>>, vector<1x256x128xf32>
      tpu.vector_store %arg8[%c0_20, %c0_21, %c0_22], %20 {strides = array<i32>} : memref<1x256x128xf32, #tpu.memory_space<vmem>>, vector<1x256x128xf32>,
    } else {
    }
    %c0_i32_1 = arith.constant 0 : i32
    %c128_i32 = arith.constant 128 : i32
    %3 = arith.muli %c0_i32_1, %c128_i32 : i32
    %4 = tpu.assume_multiple %3, 128 : i32
    %c0 = arith.constant 0 : index
    %c0_2 = arith.constant 0 : index
    %c0_3 = arith.constant 0 : index
    %5 = vector.load %arg8[%c0, %c0_2, %c0_3] : memref<1x256x128xf32, #tpu.memory_space<vmem>>, vector<1x256x128xf32>
    %c0_4 = arith.constant 0 : index
    %c0_5 = arith.constant 0 : index
    %6 = arith.index_cast %4 : i32 to index
    %7 = vector.load %arg2[%c0_4, %c0_5, %6] : memref<1x256x256xf32, #tpu.memory_space<vmem>>, vector<1x256x128xf32>
    %8 = arith.addf %5, %7 : vector<1x256x128xf32>
    %c0_6 = arith.constant 0 : index
    %c0_7 = arith.constant 0 : index
    %c0_8 = arith.constant 0 : index
    %9 = vector.load %arg8[%c0_6, %c0_7, %c0_8] : memref<1x256x128xf32, #tpu.memory_space<vmem>>, vector<1x256x128xf32>
    tpu.vector_store %arg8[%c0_6, %c0_7, %c0_8], %8 {strides = array<i32>} : memref<1x256x128xf32, #tpu.memory_space<vmem>>, vector<1x256x128xf32>,
    %c1_i32 = arith.constant 1 : i32
    %c128_i32_9 = arith.constant 128 : i32
    %10 = arith.muli %c1_i32, %c128_i32_9 : i32
    %11 = tpu.assume_multiple %10, 128 : i32
    %c0_10 = arith.constant 0 : index
    %c0_11 = arith.constant 0 : index
    %c0_12 = arith.constant 0 : index
    %12 = vector.load %arg8[%c0_10, %c0_11, %c0_12] : memref<1x256x128xf32, #tpu.memory_space<vmem>>, vector<1x256x128xf32>
    %c0_13 = arith.constant 0 : index
    %c0_14 = arith.constant 0 : index
    %13 = arith.index_cast %11 : i32 to index
    %14 = vector.load %arg2[%c0_13, %c0_14, %13] : memref<1x256x256xf32, #tpu.memory_space<vmem>>, vector<1x256x128xf32>
    %15 = arith.addf %12, %14 : vector<1x256x128xf32>
    %c0_15 = arith.constant 0 : index
    %c0_16 = arith.constant 0 : index
    %c0_17 = arith.constant 0 : index
    %16 = vector.load %arg8[%c0_15, %c0_16, %c0_17] : memref<1x256x128xf32, #tpu.memory_space<vmem>>, vector<1x256x128xf32>
    tpu.vector_store %arg8[%c0_15, %c0_16, %c0_17], %15 {strides = array<i32>} : memref<1x256x128xf32, #tpu.memory_space<vmem>>, vector<1x256x128xf32>,
    %c2_i32 = arith.constant 2 : i32
    %c0_i32_18 = arith.constant 0 : i32
    %17 = arith.cmpi eq, %arg1, %c0_i32_18 : i32
    %18 = arith.extui %17 : i1 to i32
    %c0_i32_19 = arith.constant 0 : i32
    %19 = arith.cmpi ne, %18, %c0_i32_19 : i32
    scf.if %19 {
      %c0_20 = arith.constant 0 : index
      %c0_21 = arith.constant 0 : index
      %c0_22 = arith.constant 0 : index
      %20 = vector.load %arg8[%c0_20, %c0_21, %c0_22] : memref<1x256x128xf32, #tpu.memory_space<vmem>>, vector<1x256x128xf32>
      %cst = arith.constant dense<0.000000e+00> : vector<1x256xf32>
      %21 = vector.multi_reduction <add>, %20, %cst [2] : vector<1x256x128xf32> to vector<1x256xf32>
      %cst_23 = arith.constant 3.906250e-03 : f32
      %22 = vector.broadcast %cst_23 : f32 to vector<1x256xf32>
      %23 = arith.mulf %21, %22 : vector<1x256xf32>
      %c0_24 = arith.constant 0 : index
      %c0_25 = arith.constant 0 : index
      %24 = vector.load %arg3[%c0_24, %c0_25] : memref<256x128xf32, #tpu.memory_space<vmem>>, vector<256x128xf32>
      %cst_26 = arith.constant dense<0.000000e+00> : vector<1x128xf32>
      %25 = tpu.matmul %23, %24, %cst_26 {dimension_numbers = #tpu.dot_dimension_numbers<[1], [0], [0], [1], [0, 0, 1, 1], [], []>} : vector<1x256xf32>, vector<256x128xf32>, vector<1x128xf32> -> vector<1x128xf32>
      %c0_27 = arith.constant 0 : index
      %c0_28 = arith.constant 0 : index
      %26 = vector.load %arg4[%c0_27, %c0_28] : memref<1x128xf32, #tpu.memory_space<vmem>>, vector<1x128xf32>
      %27 = arith.addf %25, %26 : vector<1x128xf32>
      %cst_29 = arith.constant 0.000000e+00 : f32
      %28 = vector.broadcast %cst_29 : f32 to vector<1x128xf32>
      %29 = arith.maximumf %27, %28 : vector<1x128xf32>
      %c0_30 = arith.constant 0 : index
      %c0_31 = arith.constant 0 : index
      %30 = vector.load %arg5[%c0_30, %c0_31] : memref<128x64xf32, #tpu.memory_space<vmem>>, vector<128x64xf32>
      %cst_32 = arith.constant dense<0.000000e+00> : vector<1x64xf32>
      %31 = tpu.matmul %29, %30, %cst_32 {dimension_numbers = #tpu.dot_dimension_numbers<[1], [0], [0], [1], [0, 0, 1, 1], [], []>} : vector<1x128xf32>, vector<128x64xf32>, vector<1x64xf32> -> vector<1x64xf32>
      %c0_33 = arith.constant 0 : index
      %c0_34 = arith.constant 0 : index
      %32 = vector.load %arg6[%c0_33, %c0_34] : memref<1x64xf32, #tpu.memory_space<vmem>>, vector<1x64xf32>
      %33 = arith.addf %31, %32 : vector<1x64xf32>
      %34 = vector.shape_cast %33 : vector<1x64xf32> to vector<1x1x64xf32>
      %c0_35 = arith.constant 0 : index
      %c0_36 = arith.constant 0 : index
      %c0_37 = arith.constant 0 : index
      %35 = vector.load %arg7[%c0_35, %c0_36, %c0_37] : memref<1x1x64xf32, #tpu.memory_space<vmem>>, vector<1x1x64xf32>
      tpu.vector_store %arg7[%c0_35, %c0_36, %c0_37], %34 {strides = array<i32>} : memref<1x1x64xf32, #tpu.memory_space<vmem>>, vector<1x1x64xf32>,
    } else {
    }
    return
  }
  func.func @transform_0(%arg0: i32, %arg1: i32) -> (i32, i32, i32) {
    %c0_i32 = arith.constant 0 : i32
    %c0_i32_0 = arith.constant 0 : i32
    return %arg0, %c0_i32, %arg1 : i32, i32, i32
  }
  func.func @transform_1(%arg0: i32, %arg1: i32) -> (i32, i32) {
    %c0_i32 = arith.constant 0 : i32
    %c0_i32_0 = arith.constant 0 : i32
    %c0_i32_1 = arith.constant 0 : i32
    return %c0_i32, %c0_i32_0 : i32, i32
  }
  func.func @transform_2(%arg0: i32, %arg1: i32) -> (i32, i32) {
    %c0_i32 = arith.constant 0 : i32
    %c0_i32_0 = arith.constant 0 : i32
    %c0_i32_1 = arith.constant 0 : i32
    return %c0_i32, %c0_i32_0 : i32, i32
  }
  func.func @transform_3(%arg0: i32, %arg1: i32) -> (i32, i32) {
    %c0_i32 = arith.constant 0 : i32
    %c0_i32_0 = arith.constant 0 : i32
    %c0_i32_1 = arith.constant 0 : i32
    return %c0_i32, %c0_i32_0 : i32, i32
  }
  func.func @transform_4(%arg0: i32, %arg1: i32) -> (i32, i32) {
    %c0_i32 = arith.constant 0 : i32
    %c0_i32_0 = arith.constant 0 : i32
    %c0_i32_1 = arith.constant 0 : i32
    return %c0_i32, %c0_i32_0 : i32, i32
  }
  func.func @transform_5(%arg0: i32, %arg1: i32) -> (i32, i32, i32) {
    %c0_i32 = arith.constant 0 : i32
    %c0_i32_0 = arith.constant 0 : i32
    %c0_i32_1 = arith.constant 0 : i32
    return %arg0, %c0_i32, %c0_i32_0 : i32, i32, i32
  }
}

</mosaic_0001>

<llo_original>
// kernel: tpu_custom_call.1
$region0: #{tpu_custom_call.1}
  #allocation0 [shape = 'u32[]', space=smem, size = 0x4, offset = 0x4, fixed_abs, tag = 'smem constant byte address 0x4 - core index']
  #allocation1 [shape = 'u32[144,128]{1,0:T(1,128)}', space=vmem, size = 0x12000, scoped, tag = 'internal scratch']
  #allocation2 [shape = 'f32[1,256,128]{2,1,0:T(8,128)}', space=vmem, size = 0x20000, scoped, tag = 'scratch operand']
  %s0 = inlined_call_operand.hbm [shape: f32[2,256,256], index: 0, kind: input, shape index: {}]
  %s1 = inlined_call_operand.hbm [shape: f32[256,128], index: 1, kind: input, shape index: {}]
  %s2 = inlined_call_operand.vmem [shape: f32[1,128], index: 2, kind: input, shape index: {}]
  %s3 = inlined_call_operand.vmem [shape: f32[128,64], index: 3, kind: input, shape index: {}]
  %s4 = inlined_call_operand.vmem [shape: f32[1,64], index: 4, kind: input, shape index: {}]
  %s5 = inlined_call_operand.hbm [shape: f32[2,1,64], index: 5, kind: output, shape index: {}]
  %s6 = sld [smem:[#allocation0]]
  $region69: #{tpu_custom_call.1} parent=0
    _
  %s8 = ssub.s32 1, %s6
  %s9 = scalar_select 0, %s8, %s6
  $region1: #{tpu_custom_call.1} parent=0
    #allocation3 [shape = 'u8[524288]{0}', space=vmem, size = 0x80000, scoped, tag = 'input window, operand 0']
    #allocation4 [shape = 's32[2]{0}', space=sflag, size = 0x8, scoped, tag = 'scoped memory for tpu_custom_call.1']
    #allocation5 [shape = 's32[2]{0}', space=sflag, size = 0x8, scoped, tag = 'scoped memory for tpu_custom_call.1']
    #allocation6 [shape = 'u8[131072]{0}', space=vmem, size = 0x20000, scoped, tag = 'input window, operand 1, single buffered']
    #allocation7 [shape = 's32[1]{0}', space=sflag, size = 0x4, scoped, tag = 'scoped memory for tpu_custom_call.1']
    #allocation8 [shape = 'u8[1024]{0}', space=vmem, size = 0x400, scoped, tag = 'output window, operand 0']
    %10 = vsyncpa [#allocation4], 0
    %s11 = scalar_lea.sflag [#allocation4], 1
    %12 = vsyncpa %s11, 0
    %13 = vsyncpa [#allocation7], 0
    %14 = vsyncpa [#allocation5], 0
    %s15 = scalar_lea.sflag [#allocation5], 1
    %16 = vsyncpa %s15, 0
    loop: start=0, step=1, limit=4
    $region2: #{tpu_custom_call.1} parent=1 // loop_pre_header
      _
    $region3: #{tpu_custom_call.1} parent=1 // loop_header
      %s18 = sphi 0, %s22
      %p19 = scmp.ge.s32.totalorder %s18, 4
      %s25 = sphi 0, %s37
      %s26 = sphi 0, %s33
      %s27 = sphi 0, %s25
      %s28 = sphi 0, %s26
      %s29 = sphi 0, %s27
      %s30 = sphi 0, %s28
      %s42 = sphi 0, %s44
      %s45 = sphi 0, %s42
      %s46 = sphi 0, %s45
      %s62 = sphi 0, %s46
      %s66 = sphi 0, %s66
      %s68 = sphi 0, %s66
      %s69 = sphi 0, %s68
      %s83 = sphi 0, %s69
      %s87 = sphi 0, %s87
      %s89 = sphi 0, %s87
      %s90 = sphi 0, %s89
      %s104 = sphi 0, %s90
      %s108 = sphi 0, %s108
      %s110 = sphi 0, %s108
      %s111 = sphi 0, %s110
      %s125 = sphi 0, %s111
      %s129 = sphi 0, %s129
      %s131 = sphi 0, %s129
      %s132 = sphi 0, %s131
      %s146 = sphi 0, %s132
      %s152 = sphi 0, %s154
      %s155 = sphi 0, %s152
      %s156 = sphi 0, %s155
      %s172 = sphi 0, %s156
    $region4: #{tpu_custom_call.1} parent=1 // loop_header_branch
      %21 = sbr.rel (%p19) target = $region8
    $region5: #{tpu_custom_call.1} parent=1 // loop_body
      %s23 = ssub.s32 %s18, 1
      %s24 = ssub.s32 %s18, 2
      %s31 = sadd.s32 1, %s26
      %p32 = scmp.ge.s32.totalorder %s31, 1
      %s33 = scalar_select %p32, 0, %s31
      %s34 = sadd.s32 1, %s25
      %s35 = scalar_select %p32, %s34, %s25
      %p36 = scmp.ge.s32.totalorder %s35, 2
      %s37 = scalar_select %p36, 0, %s35
      %s38 = ssub.s32 %s25, %s37
      %s39 = ssub.s32 %s26, %s33
      %s40 = sor.u32 %s38, %s39
      %p41 = scmp.eq.s32.totalorder %s40, 0
      %s43 = sadd.s32 %s42, 1
      %s44 = scalar_select %p41, %s42, %s43
      %p47 = pneg %p41
      %p48 = scmp.eq.s32.totalorder %s18, 1
      %p49 = por %p47, %p48
      %p50 = scmp.ne.s32.totalorder %s42, %s45
      %p51 = scmp.eq.s32.totalorder %s18, 0
      %p52 = por %p50, %p51
      %p53 = scmp.ne.s32.totalorder %s42, %s45
      %p54 = scmp.eq.s32.totalorder %s23, 1
      %p55 = por %p53, %p54
      %p56 = scmp.ne.s32.totalorder %s45, %s46
      %p57 = scmp.eq.s32.totalorder %s23, 0
      %p58 = por %p56, %p57
      %p59 = scmp.ne.s32.totalorder %s45, %s46
      %p60 = scmp.eq.s32.totalorder %s24, 1
      %p61 = por %p59, %p60
      %p63 = scmp.ne.s32.totalorder %s46, %s62
      %p64 = scmp.eq.s32.totalorder %s24, 0
      %p65 = por %p63, %p64
      %s67 = sadd.s32 %s66, 1
      %p70 = scmp.eq.s32.totalorder %s18, 1
      %p71 = scmp.ne.s32.totalorder %s66, %s68
      %p72 = scmp.eq.s32.totalorder %s18, 0
      %p73 = por %p71, %p72
      %p74 = scmp.ne.s32.totalorder %s66, %s68
      %p75 = scmp.eq.s32.totalorder %s23, 1
      %p76 = por %p74, %p75
      %p77 = scmp.ne.s32.totalorder %s68, %s69
      %p78 = scmp.eq.s32.totalorder %s23, 0
      %p79 = por %p77, %p78
      %p80 = scmp.ne.s32.totalorder %s68, %s69
      %p81 = scmp.eq.s32.totalorder %s24, 1
      %p82 = por %p80, %p81
      %p84 = scmp.ne.s32.totalorder %s69, %s83
      %p85 = scmp.eq.s32.totalorder %s24, 0
      %p86 = por %p84, %p85
      %s88 = sadd.s32 %s87, 1
      %p91 = scmp.eq.s32.totalorder %s18, 1
      %p92 = scmp.ne.s32.totalorder %s87, %s89
      %p93 = scmp.eq.s32.totalorder %s18, 0
      %p94 = por %p92, %p93
      %p95 = scmp.ne.s32.totalorder %s87, %s89
      %p96 = scmp.eq.s32.totalorder %s23, 1
      %p97 = por %p95, %p96
      %p98 = scmp.ne.s32.totalorder %s89, %s90
      %p99 = scmp.eq.s32.totalorder %s23, 0
      %p100 = por %p98, %p99
      %p101 = scmp.ne.s32.totalorder %s89, %s90
      %p102 = scmp.eq.s32.totalorder %s24, 1
      %p103 = por %p101, %p102
      %p105 = scmp.ne.s32.totalorder %s90, %s104
      %p106 = scmp.eq.s32.totalorder %s24, 0
      %p107 = por %p105, %p106
      %s109 = sadd.s32 %s108, 1
      %p112 = scmp.eq.s32.totalorder %s18, 1
      %p113 = scmp.ne.s32.totalorder %s108, %s110
      %p114 = scmp.eq.s32.totalorder %s18, 0
      %p115 = por %p113, %p114
      %p116 = scmp.ne.s32.totalorder %s108, %s110
      %p117 = scmp.eq.s32.totalorder %s23, 1
      %p118 = por %p116, %p117
      %p119 = scmp.ne.s32.totalorder %s110, %s111
      %p120 = scmp.eq.s32.totalorder %s23, 0
      %p121 = por %p119, %p120
      %p122 = scmp.ne.s32.totalorder %s110, %s111
      %p123 = scmp.eq.s32.totalorder %s24, 1
      %p124 = por %p122, %p123
      %p126 = scmp.ne.s32.totalorder %s111, %s125
      %p127 = scmp.eq.s32.totalorder %s24, 0
      %p128 = por %p126, %p127
      %s130 = sadd.s32 %s129, 1
      %p133 = scmp.eq.s32.totalorder %s18, 1
      %p134 = scmp.ne.s32.totalorder %s129, %s131
      %p135 = scmp.eq.s32.totalorder %s18, 0
      %p136 = por %p134, %p135
      %p137 = scmp.ne.s32.totalorder %s129, %s131
      %p138 = scmp.eq.s32.totalorder %s23, 1
      %p139 = por %p137, %p138
      %p140 = scmp.ne.s32.totalorder %s131, %s132
      %p141 = scmp.eq.s32.totalorder %s23, 0
      %p142 = por %p140, %p141
      %p143 = scmp.ne.s32.totalorder %s131, %s132
      %p144 = scmp.eq.s32.totalorder %s24, 1
      %p145 = por %p143, %p144
      %p147 = scmp.ne.s32.totalorder %s132, %s146
      %p148 = scmp.eq.s32.totalorder %s24, 0
      %p149 = por %p147, %p148
      %s150 = ssub.s32 %s25, %s37
      %p151 = scmp.eq.s32.totalorder %s150, 0
      %s153 = sadd.s32 %s152, 1
      %s154 = scalar_select %p151, %s152, %s153
      %p157 = pneg %p151
      %p158 = scmp.eq.s32.totalorder %s18, 1
      %p159 = por %p157, %p158
      %p160 = scmp.ne.s32.totalorder %s152, %s155
      %p161 = scmp.eq.s32.totalorder %s18, 0
      %p162 = por %p160, %p161
      %p163 = scmp.ne.s32.totalorder %s152, %s155
      %p164 = scmp.eq.s32.totalorder %s23, 1
      %p165 = por %p163, %p164
      %p166 = scmp.ne.s32.totalorder %s155, %s156
      %p167 = scmp.eq.s32.totalorder %s23, 0
      %p168 = por %p166, %p167
      %p169 = scmp.ne.s32.totalorder %s155, %s156
      %p170 = scmp.eq.s32.totalorder %s24, 1
      %p171 = por %p169, %p170
      %p173 = scmp.ne.s32.totalorder %s156, %s172
      %p174 = scmp.eq.s32.totalorder %s24, 0
      %p175 = por %p173, %p174
      %p176 = scmp.le.s32.totalorder 1, %s18
      %p177 = scmp.lt.s32.totalorder %s18, 3
      %p178 = pnand %p176, %p177
      %p179 = pneg %p178
      // Predicated region
      $region9: #{tpu_custom_call.1} parent=5 // pred_check
        _
      $region10: #{tpu_custom_call.1} parent=5 // pred_check_branch
        %181 = sbr.rel (%p178) target = $region12
      $region11: #{tpu_custom_call.1} parent=5 // pred_region
        %s182 = ssub.s32 %s18, 1
        // Predicated region
        $region13: #{tpu_custom_call.1} parent=11 // pred_check
          %p183 = pneg %p79
        $region14: #{tpu_custom_call.1} parent=11 // pred_check_branch
          %185 = sbr.rel (%p183) target = $region16
        $region15: #{tpu_custom_call.1} parent=11 // pred_region
          %s187 = ssub.s32 4096, 4096
          %188 = vsyncadd [#allocation7], %s187
          %s189 = sshll.u32 [#allocation6], 4
          %s190 = int_to_ptr.vmem [resolvable:$true] %s189
          %195 = dma.hbm_to_vmem [thread:$0]  %s1, 4096, %s190, [#allocation7], 128, 128, 8
        $region16: #{tpu_custom_call.1} parent=11 // pred_fallthru
          _
        // Predicated region
        $region17: #{tpu_custom_call.1} parent=11 // pred_check
          %p196 = pneg %p100
        $region18: #{tpu_custom_call.1} parent=11 // pred_check_branch
          %198 = sbr.rel (%p196) target = $region20
        $region19: #{tpu_custom_call.1} parent=11 // pred_region
          _
        $region20: #{tpu_custom_call.1} parent=11 // pred_fallthru
          _
        // Predicated region
        $region21: #{tpu_custom_call.1} parent=11 // pred_check
          %p199 = pneg %p121
        $region22: #{tpu_custom_call.1} parent=11 // pred_check_branch
          %201 = sbr.rel (%p199) target = $region24
        $region23: #{tpu_custom_call.1} parent=11 // pred_region
          _
        $region24: #{tpu_custom_call.1} parent=11 // pred_fallthru
          _
        // Predicated region
        $region25: #{tpu_custom_call.1} parent=11 // pred_check
          %p202 = pneg %p142
        $region26: #{tpu_custom_call.1} parent=11 // pred_check_branch
          %204 = sbr.rel (%p202) target = $region28
        $region27: #{tpu_custom_call.1} parent=11 // pred_region
          _
        $region28: #{tpu_custom_call.1} parent=11 // pred_fallthru
          _
      $region12: #{tpu_custom_call.1} parent=5 // pred_fallthru
        _
      %p205 = scmp.lt.s32.totalorder %s18, 2
      // Predicated region
      $region29: #{tpu_custom_call.1} parent=5 // pred_check
        %p206 = pneg %p205
      $region30: #{tpu_custom_call.1} parent=5 // pred_check_branch
        %208 = sbr.rel (%p206) target = $region32
      $region31: #{tpu_custom_call.1} parent=5 // pred_region
        // Predicated region
        $region33: #{tpu_custom_call.1} parent=31 // pred_check
          %p209 = pneg %p52
        $region34: #{tpu_custom_call.1} parent=31 // pred_check_branch
          %211 = sbr.rel (%p209) target = $region36
        $region35: #{tpu_custom_call.1} parent=31 // pred_region
          %s212 = sand.u32 %s42, 1
          %s213 = scalar_lea.sflag [#allocation4], %s212
          %s214 = sand.u32 %s42, 1
          %s215 = smul.addr %s214, 512
          %s216 = scalar_lea.vmem [#allocation3], %s215
          %s217 = smul.u32 2, %s26
          %s219 = ssub.s32 8192, 8192
          %220 = vsyncadd %s213, %s219
          %s221 = smul.addr %s25, 64
          %s222 = sadd.s32 %s217, %s221
          %s223 = smul.addr %s222, 128
          %s224 = scalar_lea.hbm %s0, %s223
          %s225 = sshll.u32 %s216, 4
          %s226 = int_to_ptr.vmem [resolvable:$true] %s225
          %231 = dma.hbm_to_vmem [thread:$0]  %s224, 8192, %s226, %s213, 256, 256, 16
        $region36: #{tpu_custom_call.1} parent=31 // pred_fallthru
          _
      $region32: #{tpu_custom_call.1} parent=5 // pred_fallthru
        _
      %p232 = scmp.le.s32.totalorder 1, %s18
      %p233 = scmp.lt.s32.totalorder %s18, 3
      %p234 = pnand %p232, %p233
      %p235 = pneg %p234
      // Predicated region
      $region37: #{tpu_custom_call.1} parent=5 // pred_check
        _
      $region38: #{tpu_custom_call.1} parent=5 // pred_check_branch
        %237 = sbr.rel (%p234) target = $region40
      $region39: #{tpu_custom_call.1} parent=5 // pred_region
        %s238 = ssub.s32 %s18, 1
        %s239 = sand.u32 %s45, 1
        %s240 = scalar_lea.sflag [#allocation4], %s239
        %s241 = sand.u32 %s45, 1
        %s242 = smul.addr %s241, 512
        %s243 = scalar_lea.vmem [#allocation3], %s242
        // Predicated region
        $region41: #{tpu_custom_call.1} parent=39 // pred_check
          %p244 = pneg %p58
        $region42: #{tpu_custom_call.1} parent=39 // pred_check_branch
          %246 = sbr.rel (%p244) target = $region44
        $region43: #{tpu_custom_call.1} parent=39 // pred_region
          %247 = dma.done %s240, 8192
        $region44: #{tpu_custom_call.1} parent=39 // pred_fallthru
          _
        // Predicated region
        $region45: #{tpu_custom_call.1} parent=39 // pred_check
          %p248 = pneg %p79
        $region46: #{tpu_custom_call.1} parent=39 // pred_check_branch
          %250 = sbr.rel (%p248) target = $region48
        $region47: #{tpu_custom_call.1} parent=39 // pred_region
          %251 = dma.done [#allocation7], 4096
        $region48: #{tpu_custom_call.1} parent=39 // pred_fallthru
          _
        %s252 = sand.u32 %s45, 1
        %s253 = scalar_lea.sflag [#allocation4], %s252
        %s254 = sand.u32 %s45, 1
        %s255 = smul.addr %s254, 512
        %s256 = scalar_lea.vmem [#allocation3], %s255
        %p257 = pneg %p58
        %p258 = pneg %p55
        %p259 = pneg %p79
        %p260 = pneg %p76
        %p261 = pneg %p100
        %p262 = pneg %p97
        %p263 = pneg %p121
        %p264 = pneg %p118
        %p265 = pneg %p142
        %p266 = pneg %p139
        %p267 = pneg %p168
        %p268 = pneg %p165
        %s269 = sand.u32 %s155, 1
        %s270 = scalar_lea.sflag [#allocation5], %s269
        %s271 = sand.u32 %s155, 1
        %s272 = scalar_lea.vmem [#allocation8], %s271
        %s273 = smul.u32 2, %s28
        %p274 = scmp.eq.s32.totalorder %s28, 0
        // Predicated region
        $region49: #{tpu_custom_call.1} parent=39 // pred_check
          %p275 = pneg %p274
        $region50: #{tpu_custom_call.1} parent=39 // pred_check_branch
          %277 = sbr.rel (%p275) target = $region52
        $region51: #{tpu_custom_call.1} parent=39 // pred_region
          %278 = vst [vmem:[#allocation2] sm:$0xff] 0.0
          %279 = vst [vmem:[#allocation2 + $0x8] sm:$0xff] 0.0
          %280 = vst [vmem:[#allocation2 + $0x10] sm:$0xff] 0.0
          %281 = vst [vmem:[#allocation2 + $0x18] sm:$0xff] 0.0
          %282 = vst [vmem:[#allocation2 + $0x20] sm:$0xff] 0.0
          %283 = vst [vmem:[#allocation2 + $0x28] sm:$0xff] 0.0
          %284 = vst [vmem:[#allocation2 + $0x30] sm:$0xff] 0.0
          %285 = vst [vmem:[#allocation2 + $0x38] sm:$0xff] 0.0
          %286 = vst [vmem:[#allocation2 + $0x40] sm:$0xff] 0.0
          %287 = vst [vmem:[#allocation2 + $0x48] sm:$0xff] 0.0
          %288 = vst [vmem:[#allocation2 + $0x50] sm:$0xff] 0.0
          %289 = vst [vmem:[#allocation2 + $0x58] sm:$0xff] 0.0
          %290 = vst [vmem:[#allocation2 + $0x60] sm:$0xff] 0.0
          %291 = vst [vmem:[#allocation2 + $0x68] sm:$0xff] 0.0
          %292 = vst [vmem:[#allocation2 + $0x70] sm:$0xff] 0.0
          %293 = vst [vmem:[#allocation2 + $0x78] sm:$0xff] 0.0
          %294 = vst [vmem:[#allocation2 + $0x80] sm:$0xff] 0.0
          %295 = vst [vmem:[#allocation2 + $0x88] sm:$0xff] 0.0
          %296 = vst [vmem:[#allocation2 + $0x90] sm:$0xff] 0.0
          %297 = vst [vmem:[#allocation2 + $0x98] sm:$0xff] 0.0
          %298 = vst [vmem:[#allocation2 + $0xa0] sm:$0xff] 0.0
          %299 = vst [vmem:[#allocation2 + $0xa8] sm:$0xff] 0.0
          %300 = vst [vmem:[#allocation2 + $0xb0] sm:$0xff] 0.0
          %301 = vst [vmem:[#allocation2 + $0xb8] sm:$0xff] 0.0
          %302 = vst [vmem:[#allocation2 + $0xc0] sm:$0xff] 0.0
          %303 = vst [vmem:[#allocation2 + $0xc8] sm:$0xff] 0.0
          %304 = vst [vmem:[#allocation2 + $0xd0] sm:$0xff] 0.0
          %305 = vst [vmem:[#allocation2 + $0xd8] sm:$0xff] 0.0
          %306 = vst [vmem:[#allocation2 + $0xe0] sm:$0xff] 0.0
          %307 = vst [vmem:[#allocation2 + $0xe8] sm:$0xff] 0.0
          %308 = vst [vmem:[#allocation2 + $0xf0] sm:$0xff] 0.0
          %309 = vst [vmem:[#allocation2 + $0xf8] sm:$0xff] 0.0
        $region52: #{tpu_custom_call.1} parent=39 // pred_fallthru
          _
        %v310 = vld [vmem:[#allocation2] sm:$0xff]
        %v311 = vld [vmem:[#allocation2 + $0x8] sm:$0xff]
        %v312 = vld [vmem:[#allocation2 + $0x10] sm:$0xff]
        %v313 = vld [vmem:[#allocation2 + $0x18] sm:$0xff]
        %v314 = vld [vmem:[#allocation2 + $0x20] sm:$0xff]
        %v315 = vld [vmem:[#allocation2 + $0x28] sm:$0xff]
        %v316 = vld [vmem:[#allocation2 + $0x30] sm:$0xff]
        %v317 = vld [vmem:[#allocation2 + $0x38] sm:$0xff]
        %v318 = vld [vmem:[#allocation2 + $0x40] sm:$0xff]
        %v319 = vld [vmem:[#allocation2 + $0x48] sm:$0xff]
        %v320 = vld [vmem:[#allocation2 + $0x50] sm:$0xff]
        %v321 = vld [vmem:[#allocation2 + $0x58] sm:$0xff]
        %v322 = vld [vmem:[#allocation2 + $0x60] sm:$0xff]
        %v323 = vld [vmem:[#allocation2 + $0x68] sm:$0xff]
        %v324 = vld [vmem:[#allocation2 + $0x70] sm:$0xff]
        %v325 = vld [vmem:[#allocation2 + $0x78] sm:$0xff]
        %v326 = vld [vmem:[#allocation2 + $0x80] sm:$0xff]
        %v327 = vld [vmem:[#allocation2 + $0x88] sm:$0xff]
        %v328 = vld [vmem:[#allocation2 + $0x90] sm:$0xff]
        %v329 = vld [vmem:[#allocation2 + $0x98] sm:$0xff]
        %v330 = vld [vmem:[#allocation2 + $0xa0] sm:$0xff]
        %v331 = vld [vmem:[#allocation2 + $0xa8] sm:$0xff]
        %v332 = vld [vmem:[#allocation2 + $0xb0] sm:$0xff]
        %v333 = vld [vmem:[#allocation2 + $0xb8] sm:$0xff]
        %v334 = vld [vmem:[#allocation2 + $0xc0] sm:$0xff]
        %v335 = vld [vmem:[#allocation2 + $0xc8] sm:$0xff]
        %v336 = vld [vmem:[#allocation2 + $0xd0] sm:$0xff]
        %v337 = vld [vmem:[#allocation2 + $0xd8] sm:$0xff]
        %v338 = vld [vmem:[#allocation2 + $0xe0] sm:$0xff]
        %v339 = vld [vmem:[#allocation2 + $0xe8] sm:$0xff]
        %v340 = vld [vmem:[#allocation2 + $0xf0] sm:$0xff]
        %v341 = vld [vmem:[#allocation2 + $0xf8] sm:$0xff]
        %v342 = vld [vmem:[%s243] sm:$0xff]
        %v343 = vld [vmem:[%s243 + $0x10] sm:$0xff]
        %v344 = vld [vmem:[%s243 + $0x20] sm:$0xff]
        %v345 = vld [vmem:[%s243 + $0x30] sm:$0xff]
        %v346 = vld [vmem:[%s243 + $0x40] sm:$0xff]
        %v347 = vld [vmem:[%s243 + $0x50] sm:$0xff]
        %v348 = vld [vmem:[%s243 + $0x60] sm:$0xff]
        %v349 = vld [vmem:[%s243 + $0x70] sm:$0xff]
        %v350 = vld [vmem:[%s243 + $0x80] sm:$0xff]
        %v351 = vld [vmem:[%s243 + $0x90] sm:$0xff]
        %v352 = vld [vmem:[%s243 + $0xa0] sm:$0xff]
        %v353 = vld [vmem:[%s243 + $0xb0] sm:$0xff]
        %v354 = vld [vmem:[%s243 + $0xc0] sm:$0xff]
        %v355 = vld [vmem:[%s243 + $0xd0] sm:$0xff]
        %v356 = vld [vmem:[%s243 + $0xe0] sm:$0xff]
        %v357 = vld [vmem:[%s243 + $0xf0] sm:$0xff]
        %v358 = vld [vmem:[%s243 + $0x100] sm:$0xff]
        %v359 = vld [vmem:[%s243 + $0x110] sm:$0xff]
        %v360 = vld [vmem:[%s243 + $0x120] sm:$0xff]
        %v361 = vld [vmem:[%s243 + $0x130] sm:$0xff]
        %v362 = vld [vmem:[%s243 + $0x140] sm:$0xff]
        %v363 = vld [vmem:[%s243 + $0x150] sm:$0xff]
        %v364 = vld [vmem:[%s243 + $0x160] sm:$0xff]
        %v365 = vld [vmem:[%s243 + $0x170] sm:$0xff]
        %v366 = vld [vmem:[%s243 + $0x180] sm:$0xff]
        %v367 = vld [vmem:[%s243 + $0x190] sm:$0xff]
        %v368 = vld [vmem:[%s243 + $0x1a0] sm:$0xff]
        %v369 = vld [vmem:[%s243 + $0x1b0] sm:$0xff]
        %v370 = vld [vmem:[%s243 + $0x1c0] sm:$0xff]
        %v371 = vld [vmem:[%s243 + $0x1d0] sm:$0xff]
        %v372 = vld [vmem:[%s243 + $0x1e0] sm:$0xff]
        %v373 = vld [vmem:[%s243 + $0x1f0] sm:$0xff]
        %v374 = vadd.f32 %v310, %v342
        %v375 = vadd.f32 %v311, %v343
        %v376 = vadd.f32 %v312, %v344
        %v377 = vadd.f32 %v313, %v345
        %v378 = vadd.f32 %v314, %v346
        %v379 = vadd.f32 %v315, %v347
        %v380 = vadd.f32 %v316, %v348
        %v381 = vadd.f32 %v317, %v349
        %v382 = vadd.f32 %v318, %v350
        %v383 = vadd.f32 %v319, %v351
        %v384 = vadd.f32 %v320, %v352
        %v385 = vadd.f32 %v321, %v353
        %v386 = vadd.f32 %v322, %v354
        %v387 = vadd.f32 %v323, %v355
        %v388 = vadd.f32 %v324, %v356
        %v389 = vadd.f32 %v325, %v357
        %v390 = vadd.f32 %v326, %v358
        %v391 = vadd.f32 %v327, %v359
        %v392 = vadd.f32 %v328, %v360
        %v393 = vadd.f32 %v329, %v361
        %v394 = vadd.f32 %v330, %v362
        %v395 = vadd.f32 %v331, %v363
        %v396 = vadd.f32 %v332, %v364
        %v397 = vadd.f32 %v333, %v365
        %v398 = vadd.f32 %v334, %v366
        %v399 = vadd.f32 %v335, %v367
        %v400 = vadd.f32 %v336, %v368
        %v401 = vadd.f32 %v337, %v369
        %v402 = vadd.f32 %v338, %v370
        %v403 = vadd.f32 %v339, %v371
        %v404 = vadd.f32 %v340, %v372
        %v405 = vadd.f32 %v341, %v373
        %406 = vst [vmem:[#allocation2] sm:$0xff] %v374
        %407 = vst [vmem:[#allocation2 + $0x8] sm:$0xff] %v375
        %408 = vst [vmem:[#allocation2 + $0x10] sm:$0xff] %v376
        %409 = vst [vmem:[#allocation2 + $0x18] sm:$0xff] %v377
        %410 = vst [vmem:[#allocation2 + $0x20] sm:$0xff] %v378
        %411 = vst [vmem:[#allocation2 + $0x28] sm:$0xff] %v379
        %412 = vst [vmem:[#allocation2 + $0x30] sm:$0xff] %v380
        %413 = vst [vmem:[#allocation2 + $0x38] sm:$0xff] %v381
        %414 = vst [vmem:[#allocation2 + $0x40] sm:$0xff] %v382
        %415 = vst [vmem:[#allocation2 + $0x48] sm:$0xff] %v383
        %416 = vst [vmem:[#allocation2 + $0x50] sm:$0xff] %v384
        %417 = vst [vmem:[#allocation2 + $0x58] sm:$0xff] %v385
        %418 = vst [vmem:[#allocation2 + $0x60] sm:$0xff] %v386
        %419 = vst [vmem:[#allocation2 + $0x68] sm:$0xff] %v387
        %420 = vst [vmem:[#allocation2 + $0x70] sm:$0xff] %v388
        %421 = vst [vmem:[#allocation2 + $0x78] sm:$0xff] %v389
        %422 = vst [vmem:[#allocation2 + $0x80] sm:$0xff] %v390
        %423 = vst [vmem:[#allocation2 + $0x88] sm:$0xff] %v391
        %424 = vst [vmem:[#allocation2 + $0x90] sm:$0xff] %v392
        %425 = vst [vmem:[#allocation2 + $0x98] sm:$0xff] %v393
        %426 = vst [vmem:[#allocation2 + $0xa0] sm:$0xff] %v394
        %427 = vst [vmem:[#allocation2 + $0xa8] sm:$0xff] %v395
        %428 = vst [vmem:[#allocation2 + $0xb0] sm:$0xff] %v396
        %429 = vst [vmem:[#allocation2 + $0xb8] sm:$0xff] %v397
        %430 = vst [vmem:[#allocation2 + $0xc0] sm:$0xff] %v398
        %431 = vst [vmem:[#allocation2 + $0xc8] sm:$0xff] %v399
        %432 = vst [vmem:[#allocation2 + $0xd0] sm:$0xff] %v400
        %433 = vst [vmem:[#allocation2 + $0xd8] sm:$0xff] %v401
        %434 = vst [vmem:[#allocation2 + $0xe0] sm:$0xff] %v402
        %435 = vst [vmem:[#allocation2 + $0xe8] sm:$0xff] %v403
        %436 = vst [vmem:[#allocation2 + $0xf0] sm:$0xff] %v404
        %437 = vst [vmem:[#allocation2 + $0xf8] sm:$0xff] %v405
        %v438 = vld [vmem:[#allocation2] sm:$0xff]
        %v439 = vld [vmem:[#allocation2 + $0x8] sm:$0xff]
        %v440 = vld [vmem:[#allocation2 + $0x10] sm:$0xff]
        %v441 = vld [vmem:[#allocation2 + $0x18] sm:$0xff]
        %v442 = vld [vmem:[#allocation2 + $0x20] sm:$0xff]
        %v443 = vld [vmem:[#allocation2 + $0x28] sm:$0xff]
        %v444 = vld [vmem:[#allocation2 + $0x30] sm:$0xff]
        %v445 = vld [vmem:[#allocation2 + $0x38] sm:$0xff]
        %v446 = vld [vmem:[#allocation2 + $0x40] sm:$0xff]
        %v447 = vld [vmem:[#allocation2 + $0x48] sm:$0xff]
        %v448 = vld [vmem:[#allocation2 + $0x50] sm:$0xff]
        %v449 = vld [vmem:[#allocation2 + $0x58] sm:$0xff]
        %v450 = vld [vmem:[#allocation2 + $0x60] sm:$0xff]
        %v451 = vld [vmem:[#allocation2 + $0x68] sm:$0xff]
        %v452 = vld [vmem:[#allocation2 + $0x70] sm:$0xff]
        %v453 = vld [vmem:[#allocation2 + $0x78] sm:$0xff]
        %v454 = vld [vmem:[#allocation2 + $0x80] sm:$0xff]
        %v455 = vld [vmem:[#allocation2 + $0x88] sm:$0xff]
        %v456 = vld [vmem:[#allocation2 + $0x90] sm:$0xff]
        %v457 = vld [vmem:[#allocation2 + $0x98] sm:$0xff]
        %v458 = vld [vmem:[#allocation2 + $0xa0] sm:$0xff]
        %v459 = vld [vmem:[#allocation2 + $0xa8] sm:$0xff]
        %v460 = vld [vmem:[#allocation2 + $0xb0] sm:$0xff]
        %v461 = vld [vmem:[#allocation2 + $0xb8] sm:$0xff]
        %v462 = vld [vmem:[#allocation2 + $0xc0] sm:$0xff]
        %v463 = vld [vmem:[#allocation2 + $0xc8] sm:$0xff]
        %v464 = vld [vmem:[#allocation2 + $0xd0] sm:$0xff]
        %v465 = vld [vmem:[#allocation2 + $0xd8] sm:$0xff]
        %v466 = vld [vmem:[#allocation2 + $0xe0] sm:$0xff]
        %v467 = vld [vmem:[#allocation2 + $0xe8] sm:$0xff]
        %v468 = vld [vmem:[#allocation2 + $0xf0] sm:$0xff]
        %v469 = vld [vmem:[#allocation2 + $0xf8] sm:$0xff]
        %s470 = scalar_lea.vmem %s243, 8 [#allocation3]
        %v471 = vld [vmem:[%s470] sm:$0xff]
        %v472 = vld [vmem:[%s470 + $0x10] sm:$0xff]
        %v473 = vld [vmem:[%s470 + $0x20] sm:$0xff]
        %v474 = vld [vmem:[%s470 + $0x30] sm:$0xff]
        %v475 = vld [vmem:[%s470 + $0x40] sm:$0xff]
        %v476 = vld [vmem:[%s470 + $0x50] sm:$0xff]
        %v477 = vld [vmem:[%s470 + $0x60] sm:$0xff]
        %v478 = vld [vmem:[%s470 + $0x70] sm:$0xff]
        %v479 = vld [vmem:[%s470 + $0x80] sm:$0xff]
        %v480 = vld [vmem:[%s470 + $0x90] sm:$0xff]
        %v481 = vld [vmem:[%s470 + $0xa0] sm:$0xff]
        %v482 = vld [vmem:[%s470 + $0xb0] sm:$0xff]
        %v483 = vld [vmem:[%s470 + $0xc0] sm:$0xff]
        %v484 = vld [vmem:[%s470 + $0xd0] sm:$0xff]
        %v485 = vld [vmem:[%s470 + $0xe0] sm:$0xff]
        %v486 = vld [vmem:[%s470 + $0xf0] sm:$0xff]
        %v487 = vld [vmem:[%s470 + $0x100] sm:$0xff]
        %v488 = vld [vmem:[%s470 + $0x110] sm:$0xff]
        %v489 = vld [vmem:[%s470 + $0x120] sm:$0xff]
        %v490 = vld [vmem:[%s470 + $0x130] sm:$0xff]
        %v491 = vld [vmem:[%s470 + $0x140] sm:$0xff]
        %v492 = vld [vmem:[%s470 + $0x150] sm:$0xff]
        %v493 = vld [vmem:[%s470 + $0x160] sm:$0xff]
        %v494 = vld [vmem:[%s470 + $0x170] sm:$0xff]
        %v495 = vld [vmem:[%s470 + $0x180] sm:$0xff]
        %v496 = vld [vmem:[%s470 + $0x190] sm:$0xff]
        %v497 = vld [vmem:[%s470 + $0x1a0] sm:$0xff]
        %v498 = vld [vmem:[%s470 + $0x1b0] sm:$0xff]
        %v499 = vld [vmem:[%s470 + $0x1c0] sm:$0xff]
        %v500 = vld [vmem:[%s470 + $0x1d0] sm:$0xff]
        %v501 = vld [vmem:[%s470 + $0x1e0] sm:$0xff]
        %v502 = vld [vmem:[%s470 + $0x1f0] sm:$0xff]
        %v503 = vadd.f32 %v438, %v471
        %v504 = vadd.f32 %v439, %v472
        %v505 = vadd.f32 %v440, %v473
        %v506 = vadd.f32 %v441, %v474
        %v507 = vadd.f32 %v442, %v475
        %v508 = vadd.f32 %v443, %v476
        %v509 = vadd.f32 %v444, %v477
        %v510 = vadd.f32 %v445, %v478
        %v511 = vadd.f32 %v446, %v479
        %v512 = vadd.f32 %v447, %v480
        %v513 = vadd.f32 %v448, %v481
        %v514 = vadd.f32 %v449, %v482
        %v515 = vadd.f32 %v450, %v483
        %v516 = vadd.f32 %v451, %v484
        %v517 = vadd.f32 %v452, %v485
        %v518 = vadd.f32 %v453, %v486
        %v519 = vadd.f32 %v454, %v487
        %v520 = vadd.f32 %v455, %v488
        %v521 = vadd.f32 %v456, %v489
        %v522 = vadd.f32 %v457, %v490
        %v523 = vadd.f32 %v458, %v491
        %v524 = vadd.f32 %v459, %v492
        %v525 = vadd.f32 %v460, %v493
        %v526 = vadd.f32 %v461, %v494
        %v527 = vadd.f32 %v462, %v495
        %v528 = vadd.f32 %v463, %v496
        %v529 = vadd.f32 %v464, %v497
        %v530 = vadd.f32 %v465, %v498
        %v531 = vadd.f32 %v466, %v499
        %v532 = vadd.f32 %v467, %v500
        %v533 = vadd.f32 %v468, %v501
        %v534 = vadd.f32 %v469, %v502
        %535 = vst [vmem:[#allocation2] sm:$0xff] %v503
        %536 = vst [vmem:[#allocation2 + $0x8] sm:$0xff] %v504
        %537 = vst [vmem:[#allocation2 + $0x10] sm:$0xff] %v505
        %538 = vst [vmem:[#allocation2 + $0x18] sm:$0xff] %v506
        %539 = vst [vmem:[#allocation2 + $0x20] sm:$0xff] %v507
        %540 = vst [vmem:[#allocation2 + $0x28] sm:$0xff] %v508
        %541 = vst [vmem:[#allocation2 + $0x30] sm:$0xff] %v509
        %542 = vst [vmem:[#allocation2 + $0x38] sm:$0xff] %v510
        %543 = vst [vmem:[#allocation2 + $0x40] sm:$0xff] %v511
        %544 = vst [vmem:[#allocation2 + $0x48] sm:$0xff] %v512
        %545 = vst [vmem:[#allocation2 + $0x50] sm:$0xff] %v513
        %546 = vst [vmem:[#allocation2 + $0x58] sm:$0xff] %v514
        %547 = vst [vmem:[#allocation2 + $0x60] sm:$0xff] %v515
        %548 = vst [vmem:[#allocation2 + $0x68] sm:$0xff] %v516
        %549 = vst [vmem:[#allocation2 + $0x70] sm:$0xff] %v517
        %550 = vst [vmem:[#allocation2 + $0x78] sm:$0xff] %v518
        %551 = vst [vmem:[#allocation2 + $0x80] sm:$0xff] %v519
        %552 = vst [vmem:[#allocation2 + $0x88] sm:$0xff] %v520
        %553 = vst [vmem:[#allocation2 + $0x90] sm:$0xff] %v521
        %554 = vst [vmem:[#allocation2 + $0x98] sm:$0xff] %v522
        %555 = vst [vmem:[#allocation2 + $0xa0] sm:$0xff] %v523
        %556 = vst [vmem:[#allocation2 + $0xa8] sm:$0xff] %v524
        %557 = vst [vmem:[#allocation2 + $0xb0] sm:$0xff] %v525
        %558 = vst [vmem:[#allocation2 + $0xb8] sm:$0xff] %v526
        %559 = vst [vmem:[#allocation2 + $0xc0] sm:$0xff] %v527
        %560 = vst [vmem:[#allocation2 + $0xc8] sm:$0xff] %v528
        %561 = vst [vmem:[#allocation2 + $0xd0] sm:$0xff] %v529
        %562 = vst [vmem:[#allocation2 + $0xd8] sm:$0xff] %v530
        %563 = vst [vmem:[#allocation2 + $0xe0] sm:$0xff] %v531
        %564 = vst [vmem:[#allocation2 + $0xe8] sm:$0xff] %v532
        %565 = vst [vmem:[#allocation2 + $0xf0] sm:$0xff] %v533
        %566 = vst [vmem:[#allocation2 + $0xf8] sm:$0xff] %v534
        // Predicated region
        $region53: #{tpu_custom_call.1} parent=39 // pred_check
          %p567 = pneg %p274
        $region54: #{tpu_custom_call.1} parent=39 // pred_check_branch
          %569 = sbr.rel (%p567) target = $region56
        $region55: #{tpu_custom_call.1} parent=39 // pred_region
          %v570 = vld [vmem:[#allocation2] sm:$0xff]
          %v571 = vld [vmem:[#allocation2 + $0x8] sm:$0xff]
          %v572 = vld [vmem:[#allocation2 + $0x10] sm:$0xff]
          %v573 = vld [vmem:[#allocation2 + $0x18] sm:$0xff]
          %v574 = vld [vmem:[#allocation2 + $0x20] sm:$0xff]
          %v575 = vld [vmem:[#allocation2 + $0x28] sm:$0xff]
          %v576 = vld [vmem:[#allocation2 + $0x30] sm:$0xff]
          %v577 = vld [vmem:[#allocation2 + $0x38] sm:$0xff]
          %v578 = vld [vmem:[#allocation2 + $0x40] sm:$0xff]
          %v579 = vld [vmem:[#allocation2 + $0x48] sm:$0xff]
          %v580 = vld [vmem:[#allocation2 + $0x50] sm:$0xff]
          %v581 = vld [vmem:[#allocation2 + $0x58] sm:$0xff]
          %v582 = vld [vmem:[#allocation2 + $0x60] sm:$0xff]
          %v583 = vld [vmem:[#allocation2 + $0x68] sm:$0xff]
          %v584 = vld [vmem:[#allocation2 + $0x70] sm:$0xff]
          %v585 = vld [vmem:[#allocation2 + $0x78] sm:$0xff]
          %v586 = vld [vmem:[#allocation2 + $0x80] sm:$0xff]
          %v587 = vld [vmem:[#allocation2 + $0x88] sm:$0xff]
          %v588 = vld [vmem:[#allocation2 + $0x90] sm:$0xff]
          %v589 = vld [vmem:[#allocation2 + $0x98] sm:$0xff]
          %v590 = vld [vmem:[#allocation2 + $0xa0] sm:$0xff]
          %v591 = vld [vmem:[#allocation2 + $0xa8] sm:$0xff]
          %v592 = vld [vmem:[#allocation2 + $0xb0] sm:$0xff]
          %v593 = vld [vmem:[#allocation2 + $0xb8] sm:$0xff]
          %v594 = vld [vmem:[#allocation2 + $0xc0] sm:$0xff]
          %v595 = vld [vmem:[#allocation2 + $0xc8] sm:$0xff]
          %v596 = vld [vmem:[#allocation2 + $0xd0] sm:$0xff]
          %v597 = vld [vmem:[#allocation2 + $0xd8] sm:$0xff]
          %v598 = vld [vmem:[#allocation2 + $0xe0] sm:$0xff]
          %v599 = vld [vmem:[#allocation2 + $0xe8] sm:$0xff]
          %v600 = vld [vmem:[#allocation2 + $0xf0] sm:$0xff]
          %v601 = vld [vmem:[#allocation2 + $0xf8] sm:$0xff]
          %602 = vadd.xlane.f32.xlu0 %v570
          %v603 = vpop.xlane.xlu0 %602
          %604 = vadd.xlane.f32.xlu0 %v571
          %v605 = vpop.xlane.xlu0 %604
          %606 = vadd.xlane.f32.xlu0 %v572
          %v607 = vpop.xlane.xlu0 %606
          %608 = vadd.xlane.f32.xlu0 %v573
          %v609 = vpop.xlane.xlu0 %608
          %610 = vadd.xlane.f32.xlu0 %v574
          %v611 = vpop.xlane.xlu0 %610
          %612 = vadd.xlane.f32.xlu0 %v575
          %v613 = vpop.xlane.xlu0 %612
          %614 = vadd.xlane.f32.xlu0 %v576
          %v615 = vpop.xlane.xlu0 %614
          %616 = vadd.xlane.f32.xlu0 %v577
          %v617 = vpop.xlane.xlu0 %616
          %618 = vadd.xlane.f32.xlu0 %v578
          %v619 = vpop.xlane.xlu0 %618
          %620 = vadd.xlane.f32.xlu0 %v579
          %v621 = vpop.xlane.xlu0 %620
          %622 = vadd.xlane.f32.xlu0 %v580
          %v623 = vpop.xlane.xlu0 %622
          %624 = vadd.xlane.f32.xlu0 %v581
          %v625 = vpop.xlane.xlu0 %624
          %626 = vadd.xlane.f32.xlu0 %v582
          %v627 = vpop.xlane.xlu0 %626
          %628 = vadd.xlane.f32.xlu0 %v583
          %v629 = vpop.xlane.xlu0 %628
          %630 = vadd.xlane.f32.xlu0 %v584
          %v631 = vpop.xlane.xlu0 %630
          %632 = vadd.xlane.f32.xlu0 %v585
          %v633 = vpop.xlane.xlu0 %632
          %634 = vadd.xlane.f32.xlu0 %v586
          %v635 = vpop.xlane.xlu0 %634
          %636 = vadd.xlane.f32.xlu0 %v587
          %v637 = vpop.xlane.xlu0 %636
          %638 = vadd.xlane.f32.xlu0 %v588
          %v639 = vpop.xlane.xlu0 %638
          %640 = vadd.xlane.f32.xlu0 %v589
          %v641 = vpop.xlane.xlu0 %640
          %642 = vadd.xlane.f32.xlu0 %v590
          %v643 = vpop.xlane.xlu0 %642
          %644 = vadd.xlane.f32.xlu0 %v591
          %v645 = vpop.xlane.xlu0 %644
          %646 = vadd.xlane.f32.xlu0 %v592
          %v647 = vpop.xlane.xlu0 %646
          %648 = vadd.xlane.f32.xlu0 %v593
          %v649 = vpop.xlane.xlu0 %648
          %650 = vadd.xlane.f32.xlu0 %v594
          %v651 = vpop.xlane.xlu0 %650
          %652 = vadd.xlane.f32.xlu0 %v595
          %v653 = vpop.xlane.xlu0 %652
          %654 = vadd.xlane.f32.xlu0 %v596
          %v655 = vpop.xlane.xlu0 %654
          %656 = vadd.xlane.f32.xlu0 %v597
          %v657 = vpop.xlane.xlu0 %656
          %658 = vadd.xlane.f32.xlu0 %v598
          %v659 = vpop.xlane.xlu0 %658
          %660 = vadd.xlane.f32.xlu0 %v599
          %v661 = vpop.xlane.xlu0 %660
          %662 = vadd.xlane.f32.xlu0 %v600
          %v663 = vpop.xlane.xlu0 %662
          %664 = vadd.xlane.f32.xlu0 %v601
          %v665 = vpop.xlane.xlu0 %664
          %v666 = vmul.f32 %v603, 0.00390625
          %v667 = vmul.f32 %v605, 0.00390625
          %v668 = vmul.f32 %v607, 0.00390625
          %v669 = vmul.f32 %v609, 0.00390625
          %v670 = vmul.f32 %v611, 0.00390625
          %v671 = vmul.f32 %v613, 0.00390625
          %v672 = vmul.f32 %v615, 0.00390625
          %v673 = vmul.f32 %v617, 0.00390625
          %v674 = vmul.f32 %v619, 0.00390625
          %v675 = vmul.f32 %v621, 0.00390625
          %v676 = vmul.f32 %v623, 0.00390625
          %v677 = vmul.f32 %v625, 0.00390625
          %v678 = vmul.f32 %v627, 0.00390625
          %v679 = vmul.f32 %v629, 0.00390625
          %v680 = vmul.f32 %v631, 0.00390625
          %v681 = vmul.f32 %v633, 0.00390625
          %v682 = vmul.f32 %v635, 0.00390625
          %v683 = vmul.f32 %v637, 0.00390625
          %v684 = vmul.f32 %v639, 0.00390625
          %v685 = vmul.f32 %v641, 0.00390625
          %v686 = vmul.f32 %v643, 0.00390625
          %v687 = vmul.f32 %v645, 0.00390625
          %v688 = vmul.f32 %v647, 0.00390625
          %v689 = vmul.f32 %v649, 0.00390625
          %v690 = vmul.f32 %v651, 0.00390625
          %v691 = vmul.f32 %v653, 0.00390625
          %v692 = vmul.f32 %v655, 0.00390625
          %v693 = vmul.f32 %v657, 0.00390625
          %v694 = vmul.f32 %v659, 0.00390625
          %v695 = vmul.f32 %v661, 0.00390625
          %v696 = vmul.f32 %v663, 0.00390625
          %v697 = vmul.f32 %v665, 0.00390625
          %v698 = vld [vmem:[#allocation6] sm:$0xff]
          %v699 = vld [vmem:[#allocation6 + $0x8] sm:$0xff]
          %v700 = vld [vmem:[#allocation6 + $0x10] sm:$0xff]
          %v701 = vld [vmem:[#allocation6 + $0x18] sm:$0xff]
          %v702 = vld [vmem:[#allocation6 + $0x20] sm:$0xff]
          %v703 = vld [vmem:[#allocation6 + $0x28] sm:$0xff]
          %v704 = vld [vmem:[#allocation6 + $0x30] sm:$0xff]
          %v705 = vld [vmem:[#allocation6 + $0x38] sm:$0xff]
          %v706 = vld [vmem:[#allocation6 + $0x40] sm:$0xff]
          %v707 = vld [vmem:[#allocation6 + $0x48] sm:$0xff]
          %v708 = vld [vmem:[#allocation6 + $0x50] sm:$0xff]
          %v709 = vld [vmem:[#allocation6 + $0x58] sm:$0xff]
          %v710 = vld [vmem:[#allocation6 + $0x60] sm:$0xff]
          %v711 = vld [vmem:[#allocation6 + $0x68] sm:$0xff]
          %v712 = vld [vmem:[#allocation6 + $0x70] sm:$0xff]
          %v713 = vld [vmem:[#allocation6 + $0x78] sm:$0xff]
          %v714 = vld [vmem:[#allocation6 + $0x80] sm:$0xff]
          %v715 = vld [vmem:[#allocation6 + $0x88] sm:$0xff]
          %v716 = vld [vmem:[#allocation6 + $0x90] sm:$0xff]
          %v717 = vld [vmem:[#allocation6 + $0x98] sm:$0xff]
          %v718 = vld [vmem:[#allocation6 + $0xa0] sm:$0xff]
          %v719 = vld [vmem:[#allocation6 + $0xa8] sm:$0xff]
          %v720 = vld [vmem:[#allocation6 + $0xb0] sm:$0xff]
          %v721 = vld [vmem:[#allocation6 + $0xb8] sm:$0xff]
          %v722 = vld [vmem:[#allocation6 + $0xc0] sm:$0xff]
          %v723 = vld [vmem:[#allocation6 + $0xc8] sm:$0xff]
          %v724 = vld [vmem:[#allocation6 + $0xd0] sm:$0xff]
          %v725 = vld [vmem:[#allocation6 + $0xd8] sm:$0xff]
          %v726 = vld [vmem:[#allocation6 + $0xe0] sm:$0xff]
          %v727 = vld [vmem:[#allocation6 + $0xe8] sm:$0xff]
          %v728 = vld [vmem:[#allocation6 + $0xf0] sm:$0xff]
          %v729 = vld [vmem:[#allocation6 + $0xf8] sm:$0xff]
          %v730 = vld [vmem:[%s2] sm:$0x1]
          %v763 = vlaneseq
          %v764 = vand.u32 %v763, 127
          %v765 = vlaneseq
          %v766 = vshrl.u32 %v765, 7
          %v767 = vsub.s32 %v764, %v766
          %v768 = vrot.slane %v666, %v767
          %v769 = vadd.s32 %v764, 4294967288
          %v770 = vlaneseq
          %v771 = vshrl.u32 %v770, 7
          %v772 = vsub.s32 %v769, %v771
          %v773 = vrot.slane %v667, %v772
          %vm774 = vcmask 130112
          %v775 = vsel %vm774, %v773, %v768
          %v776 = vadd.s32 %v764, 4294967280
          %v777 = vlaneseq
          %v778 = vshrl.u32 %v777, 7
          %v779 = vsub.s32 %v776, %v778
          %v780 = vrot.slane %v668, %v779
          %vm781 = vcmask 195712
          %v782 = vsel %vm781, %v780, %v775
          %v783 = vadd.s32 %v764, 4294967272
          %v784 = vlaneseq
          %v785 = vshrl.u32 %v784, 7
          %v786 = vsub.s32 %v783, %v785
          %v787 = vrot.slane %v669, %v786
          %vm788 = vcmask 261312
          %v789 = vsel %vm788, %v787, %v782
          %v790 = vadd.s32 %v764, 4294967264
          %v791 = vlaneseq
          %v792 = vshrl.u32 %v791, 7
          %v793 = vsub.s32 %v790, %v792
          %v794 = vrot.slane %v670, %v793
          %vm795 = vcmask 326912
          %v796 = vsel %vm795, %v794, %v789
          %v797 = vadd.s32 %v764, 4294967256
          %v798 = vlaneseq
          %v799 = vshrl.u32 %v798, 7
          %v800 = vsub.s32 %v797, %v799
          %v801 = vrot.slane %v671, %v800
          %vm802 = vcmask 392512
          %v803 = vsel %vm802, %v801, %v796
          %v804 = vadd.s32 %v764, 4294967248
          %v805 = vlaneseq
          %v806 = vshrl.u32 %v805, 7
          %v807 = vsub.s32 %v804, %v806
          %v808 = vrot.slane %v672, %v807
          %vm809 = vcmask 458112
          %v810 = vsel %vm809, %v808, %v803
          %v811 = vadd.s32 %v764, 4294967240
          %v812 = vlaneseq
          %v813 = vshrl.u32 %v812, 7
          %v814 = vsub.s32 %v811, %v813
          %v815 = vrot.slane %v673, %v814
          %vm816 = vcmask 523712
          %v817 = vsel %vm816, %v815, %v810
          %v818 = vadd.s32 %v764, 4294967232
          %v819 = vlaneseq
          %v820 = vshrl.u32 %v819, 7
          %v821 = vsub.s32 %v818, %v820
          %v822 = vrot.slane %v674, %v821
          %vm823 = vcmask 589312
          %v824 = vsel %vm823, %v822, %v817
          %v825 = vadd.s32 %v764, 4294967224
          %v826 = vlaneseq
          %v827 = vshrl.u32 %v826, 7
          %v828 = vsub.s32 %v825, %v827
          %v829 = vrot.slane %v675, %v828
          %vm830 = vcmask 654912
          %v831 = vsel %vm830, %v829, %v824
          %v832 = vadd.s32 %v764, 4294967216
          %v833 = vlaneseq
          %v834 = vshrl.u32 %v833, 7
          %v835 = vsub.s32 %v832, %v834
          %v836 = vrot.slane %v676, %v835
          %vm837 = vcmask 720512
          %v838 = vsel %vm837, %v836, %v831
          %v839 = vadd.s32 %v764, 4294967208
          %v840 = vlaneseq
          %v841 = vshrl.u32 %v840, 7
          %v842 = vsub.s32 %v839, %v841
          %v843 = vrot.slane %v677, %v842
          %vm844 = vcmask 786112
          %v845 = vsel %vm844, %v843, %v838
          %v846 = vadd.s32 %v764, 4294967200
          %v847 = vlaneseq
          %v848 = vshrl.u32 %v847, 7
          %v849 = vsub.s32 %v846, %v848
          %v850 = vrot.slane %v678, %v849
          %vm851 = vcmask 851712
          %v852 = vsel %vm851, %v850, %v845
          %v853 = vadd.s32 %v764, 4294967192
          %v854 = vlaneseq
          %v855 = vshrl.u32 %v854, 7
          %v856 = vsub.s32 %v853, %v855
          %v857 = vrot.slane %v679, %v856
          %vm858 = vcmask 917312
          %v859 = vsel %vm858, %v857, %v852
          %v860 = vadd.s32 %v764, 4294967184
          %v861 = vlaneseq
          %v862 = vshrl.u32 %v861, 7
          %v863 = vsub.s32 %v860, %v862
          %v864 = vrot.slane %v680, %v863
          %vm865 = vcmask 982912
          %v866 = vsel %vm865, %v864, %v859
          %v867 = vadd.s32 %v764, 4294967176
          %v868 = vlaneseq
          %v869 = vshrl.u32 %v868, 7
          %v870 = vsub.s32 %v867, %v869
          %v871 = vrot.slane %v681, %v870
          %vm872 = vcmask 1048512
          %v873 = vsel %vm872, %v871, %v866
          %v874 = vlaneseq
          %v875 = vshrl.u32 %v874, 7
          %v876 = vsub.s32 %v764, %v875
          %v877 = vrot.slane %v682, %v876
          %v878 = vlaneseq
          %v879 = vshrl.u32 %v878, 7
          %v880 = vsub.s32 %v769, %v879
          %v881 = vrot.slane %v683, %v880
          %v882 = vsel %vm774, %v881, %v877
          %v883 = vlaneseq
          %v884 = vshrl.u32 %v883, 7
          %v885 = vsub.s32 %v776, %v884
          %v886 = vrot.slane %v684, %v885
          %v887 = vsel %vm781, %v886, %v882
          %v888 = vlaneseq
          %v889 = vshrl.u32 %v888, 7
          %v890 = vsub.s32 %v783, %v889
          %v891 = vrot.slane %v685, %v890
          %v892 = vsel %vm788, %v891, %v887
          %v893 = vlaneseq
          %v894 = vshrl.u32 %v893, 7
          %v895 = vsub.s32 %v790, %v894
          %v896 = vrot.slane %v686, %v895
          %v897 = vsel %vm795, %v896, %v892
          %v898 = vlaneseq
          %v899 = vshrl.u32 %v898, 7
          %v900 = vsub.s32 %v797, %v899
          %v901 = vrot.slane %v687, %v900
          %v902 = vsel %vm802, %v901, %v897
          %v903 = vlaneseq
          %v904 = vshrl.u32 %v903, 7
          %v905 = vsub.s32 %v804, %v904
          %v906 = vrot.slane %v688, %v905
          %v907 = vsel %vm809, %v906, %v902
          %v908 = vlaneseq
          %v909 = vshrl.u32 %v908, 7
          %v910 = vsub.s32 %v811, %v909
          %v911 = vrot.slane %v689, %v910
          %v912 = vsel %vm816, %v911, %v907
          %v913 = vlaneseq
          %v914 = vshrl.u32 %v913, 7
          %v915 = vsub.s32 %v818, %v914
          %v916 = vrot.slane %v690, %v915
          %v917 = vsel %vm823, %v916, %v912
          %v918 = vlaneseq
          %v919 = vshrl.u32 %v918, 7
          %v920 = vsub.s32 %v825, %v919
          %v921 = vrot.slane %v691, %v920
          %v922 = vsel %vm830, %v921, %v917
          %v923 = vlaneseq
          %v924 = vshrl.u32 %v923, 7
          %v925 = vsub.s32 %v832, %v924
          %v926 = vrot.slane %v692, %v925
          %v927 = vsel %vm837, %v926, %v922
          %v928 = vlaneseq
          %v929 = vshrl.u32 %v928, 7
          %v930 = vsub.s32 %v839, %v929
          %v931 = vrot.slane %v693, %v930
          %v932 = vsel %vm844, %v931, %v927
          %v933 = vlaneseq
          %v934 = vshrl.u32 %v933, 7
          %v935 = vsub.s32 %v846, %v934
          %v936 = vrot.slane %v694, %v935
          %v937 = vsel %vm851, %v936, %v932
          %v938 = vlaneseq
          %v939 = vshrl.u32 %v938, 7
          %v940 = vsub.s32 %v853, %v939
          %v941 = vrot.slane %v695, %v940
          %v942 = vsel %vm858, %v941, %v937
          %v943 = vlaneseq
          %v944 = vshrl.u32 %v943, 7
          %v945 = vsub.s32 %v860, %v944
          %v946 = vrot.slane %v696, %v945
          %v947 = vsel %vm865, %v946, %v942
          %v948 = vlaneseq
          %v949 = vshrl.u32 %v948, 7
          %v950 = vsub.s32 %v867, %v949
          %v951 = vrot.slane %v697, %v950
          %v952 = vsel %vm872, %v951, %v947
          %955 = vmatprep.subr.mxu0 0.0
          %956 = vmatpush1.msra.mxu0 %v713
          %957 = vmatprep.subr.mxu0 0.0
          %958 = vmatpush1.msra.mxu0 %v712
          %959 = vmatprep.subr.mxu0 0.0
          %960 = vmatpush1.msra.mxu0 %v711
          %961 = vmatprep.subr.mxu0 0.0
          %962 = vmatpush1.msra.mxu0 %v710
          %963 = vmatprep.subr.mxu0 0.0
          %964 = vmatpush1.msra.mxu0 %v709
          %965 = vmatprep.subr.mxu0 0.0
          %966 = vmatpush1.msra.mxu0 %v708
          %967 = vmatprep.subr.mxu0 0.0
          %968 = vmatpush1.msra.mxu0 %v707
          %969 = vmatprep.subr.mxu0 0.0
          %970 = vmatpush1.msra.mxu0 %v706
          %971 = vmatprep.subr.mxu0 0.0
          %972 = vmatpush1.msra.mxu0 %v705
          %973 = vmatprep.subr.mxu0 0.0
          %974 = vmatpush1.msra.mxu0 %v704
          %975 = vmatprep.subr.mxu0 0.0
          %976 = vmatpush1.msra.mxu0 %v703
          %977 = vmatprep.subr.mxu0 0.0
          %978 = vmatpush1.msra.mxu0 %v702
          %979 = vmatprep.subr.mxu0 0.0
          %980 = vmatpush1.msra.mxu0 %v701
          %981 = vmatprep.subr.mxu0 0.0
          %982 = vmatpush1.msra.mxu0 %v700
          %983 = vmatprep.subr.mxu0 0.0
          %984 = vmatpush1.msra.mxu0 %v699
          %985 = vmatprep.subr.mxu0 0.0
          %986 = vmatpush1.msra.mxu0 %v698
          %987 = vmatprep.subr.mxu0 0.0
          %988 = vmatpush2.msra.mxu0 %v729
          %989 = vmatprep.subr.mxu0 0.0
          %990 = vmatpush2.msra.mxu0 %v728
          %991 = vmatprep.subr.mxu0 0.0
          %992 = vmatpush2.msra.mxu0 %v727
          %993 = vmatprep.subr.mxu0 0.0
          %994 = vmatpush2.msra.mxu0 %v726
          %995 = vmatprep.subr.mxu0 0.0
          %996 = vmatpush2.msra.mxu0 %v725
          %997 = vmatprep.subr.mxu0 0.0
          %998 = vmatpush2.msra.mxu0 %v724
          %999 = vmatprep.subr.mxu0 0.0
          %1000 = vmatpush2.msra.mxu0 %v723
          %1001 = vmatprep.subr.mxu0 0.0
          %1002 = vmatpush2.msra.mxu0 %v722
          %1003 = vmatprep.subr.mxu0 0.0
          %1004 = vmatpush2.msra.mxu0 %v721
          %1005 = vmatprep.subr.mxu0 0.0
          %1006 = vmatpush2.msra.mxu0 %v720
          %1007 = vmatprep.subr.mxu0 0.0
          %1008 = vmatpush2.msra.mxu0 %v719
          %1009 = vmatprep.subr.mxu0 0.0
          %1010 = vmatpush2.msra.mxu0 %v718
          %1011 = vmatprep.subr.mxu0 0.0
          %1012 = vmatpush2.msra.mxu0 %v717
          %1013 = vmatprep.subr.mxu0 0.0
          %1014 = vmatpush2.msra.mxu0 %v716
          %1015 = vmatprep.subr.mxu0 0.0
          %1016 = vmatpush2.msra.mxu0 %v715
          %1017 = vmatprep.subr.mxu0 0.0
          %1018 = vmatpush2.msra.mxu0 %v714
          %1019 = vmatprep.mubr.f32.mxu0 %v952
          %1020 = vmatmul.mubr.f32.gmra.mxu0 %v873
          %v1021 = vpop.f32.mrf.mxu0
          %v1022 = vadd.f32 %v730, %v1021
          %v1023 = vpop.f32.mrf.mxu0
          %1024 = vdwg.mxu0
          %v1025 = vmax.f32 %v1022, 0.0
          %v1026 = vld [vmem:[%s3] sm:$0xff]
          %v1027 = vld [vmem:[%s3 + $0x8] sm:$0xff]
          %v1028 = vld [vmem:[%s3 + $0x10] sm:$0xff]
          %v1029 = vld [vmem:[%s3 + $0x18] sm:$0xff]
          %v1030 = vld [vmem:[%s3 + $0x20] sm:$0xff]
          %v1031 = vld [vmem:[%s3 + $0x28] sm:$0xff]
          %v1032 = vld [vmem:[%s3 + $0x30] sm:$0xff]
          %v1033 = vld [vmem:[%s3 + $0x38] sm:$0xff]
          %v1034 = vld [vmem:[%s3 + $0x40] sm:$0xff]
          %v1035 = vld [vmem:[%s3 + $0x48] sm:$0xff]
          %v1036 = vld [vmem:[%s3 + $0x50] sm:$0xff]
          %v1037 = vld [vmem:[%s3 + $0x58] sm:$0xff]
          %v1038 = vld [vmem:[%s3 + $0x60] sm:$0xff]
          %v1039 = vld [vmem:[%s3 + $0x68] sm:$0xff]
          %v1040 = vld [vmem:[%s3 + $0x70] sm:$0xff]
          %v1041 = vld [vmem:[%s3 + $0x78] sm:$0xff]
          %v1042 = vld [vmem:[%s4] sm:$0x1]
          %1043 = vmatprep.subr.mxu0 0.0
          %1044 = vmatpush1.msra.mxu0 %v1041
          %1045 = vmatprep.subr.mxu0 0.0
          %1046 = vmatpush1.msra.mxu0 %v1040
          %1047 = vmatprep.subr.mxu0 0.0
          %1048 = vmatpush1.msra.mxu0 %v1039
          %1049 = vmatprep.subr.mxu0 0.0
          %1050 = vmatpush1.msra.mxu0 %v1038
          %1051 = vmatprep.subr.mxu0 0.0
          %1052 = vmatpush1.msra.mxu0 %v1037
          %1053 = vmatprep.subr.mxu0 0.0
          %1054 = vmatpush1.msra.mxu0 %v1036
          %1055 = vmatprep.subr.mxu0 0.0
          %1056 = vmatpush1.msra.mxu0 %v1035
          %1057 = vmatprep.subr.mxu0 0.0
          %1058 = vmatpush1.msra.mxu0 %v1034
          %1059 = vmatprep.subr.mxu0 0.0
          %1060 = vmatpush1.msra.mxu0 %v1033
          %1061 = vmatprep.subr.mxu0 0.0
          %1062 = vmatpush1.msra.mxu0 %v1032
          %1063 = vmatprep.subr.mxu0 0.0
          %1064 = vmatpush1.msra.mxu0 %v1031
          %1065 = vmatprep.subr.mxu0 0.0
          %1066 = vmatpush1.msra.mxu0 %v1030
          %1067 = vmatprep.subr.mxu0 0.0
          %1068 = vmatpush1.msra.mxu0 %v1029
          %1069 = vmatprep.subr.mxu0 0.0
          %1070 = vmatpush1.msra.mxu0 %v1028
          %1071 = vmatprep.subr.mxu0 0.0
          %1072 = vmatpush1.msra.mxu0 %v1027
          %1073 = vmatprep.subr.mxu0 0.0
          %1074 = vmatpush1.msra.mxu0 %v1026
          %1075 = vmatprep.subr.mxu0 0.0
          %1076 = vmatpush2.msra.mxu0 0.0
          %1077 = vmatprep.subr.mxu0 0.0
          %1078 = vmatpush2.msra.mxu0 0.0
          %1079 = vmatprep.subr.mxu0 0.0
          %1080 = vmatpush2.msra.mxu0 0.0
          %1081 = vmatprep.subr.mxu0 0.0
          %1082 = vmatpush2.msra.mxu0 0.0
          %1083 = vmatprep.subr.mxu0 0.0
          %1084 = vmatpush2.msra.mxu0 0.0
          %1085 = vmatprep.subr.mxu0 0.0
          %1086 = vmatpush2.msra.mxu0 0.0
          %1087 = vmatprep.subr.mxu0 0.0
          %1088 = vmatpush2.msra.mxu0 0.0
          %1089 = vmatprep.subr.mxu0 0.0
          %1090 = vmatpush2.msra.mxu0 0.0
          %1091 = vmatprep.subr.mxu0 0.0
          %1092 = vmatpush2.msra.mxu0 0.0
          %1093 = vmatprep.subr.mxu0 0.0
          %1094 = vmatpush2.msra.mxu0 0.0
          %1095 = vmatprep.subr.mxu0 0.0
          %1096 = vmatpush2.msra.mxu0 0.0
          %1097 = vmatprep.subr.mxu0 0.0
          %1098 = vmatpush2.msra.mxu0 0.0
          %1099 = vmatprep.subr.mxu0 0.0
          %1100 = vmatpush2.msra.mxu0 0.0
          %1101 = vmatprep.subr.mxu0 0.0
          %1102 = vmatpush2.msra.mxu0 0.0
          %1103 = vmatprep.subr.mxu0 0.0
          %1104 = vmatpush2.msra.mxu0 0.0
          %1105 = vmatprep.subr.mxu0 0.0
          %1106 = vmatpush2.msra.mxu0 0.0
          %1107 = vmatprep.mubr.f32.mxu0 0.0
          %1108 = vmatmul.mubr.f32.gmra.mxu0 %v1025
          %v1109 = vpop.f32.mrf.mxu0
          %v1110 = vadd.f32 %v1042, %v1109
          %v1111 = vpop.f32.mrf.mxu0
          %1112 = vdwg.mxu0
          %vm1113 = vcmask 516096
          %1114 = vst.msk [vmem:[%s272] sm:$0x1] %vm1113, %v1110
        $region56: #{tpu_custom_call.1} parent=39 // pred_fallthru
          _
        %s1115 = sand.u32 %s155, 1
        %s1116 = scalar_lea.sflag [#allocation5], %s1115
        %s1117 = sand.u32 %s155, 1
        %s1118 = scalar_lea.vmem [#allocation8], %s1117
        // Predicated region
        $region57: #{tpu_custom_call.1} parent=39 // pred_check
          %p1119 = pneg %p165
        $region58: #{tpu_custom_call.1} parent=39 // pred_check_branch
          %1121 = sbr.rel (%p1119) target = $region60
        $region59: #{tpu_custom_call.1} parent=39 // pred_region
          %s1123 = ssub.s32 16, 16
          %1124 = vsyncadd %s1116, %s1123
          %s1125 = smul.addr %s27, 16
          %s1126 = scalar_lea.hbm %s5, %s1125
          %s1128 = sshll.u32 %s1118, 4
          %s1129 = int_to_ptr.vmem [resolvable:$true] %s1128
          %1131 = dma.vmem_to_hbm [thread:$0]  %s1129, 16, %s1126, %s1116
        $region60: #{tpu_custom_call.1} parent=39 // pred_fallthru
          _
      $region40: #{tpu_custom_call.1} parent=5 // pred_fallthru
        _
      %p1132 = scmp.le.s32.totalorder 2, %s18
      // Predicated region
      $region61: #{tpu_custom_call.1} parent=5 // pred_check
        %p1133 = pneg %p1132
      $region62: #{tpu_custom_call.1} parent=5 // pred_check_branch
        %1135 = sbr.rel (%p1133) target = $region64
      $region63: #{tpu_custom_call.1} parent=5 // pred_region
        %s1136 = ssub.s32 %s18, 2
        // Predicated region
        $region65: #{tpu_custom_call.1} parent=63 // pred_check
          %p1137 = pneg %p171
        $region66: #{tpu_custom_call.1} parent=63 // pred_check_branch
          %1139 = sbr.rel (%p1137) target = $region68
        $region67: #{tpu_custom_call.1} parent=63 // pred_region
          %s1140 = sand.u32 %s156, 1
          %s1141 = scalar_lea.sflag [#allocation5], %s1140
          %s1142 = sand.u32 %s156, 1
          %s1143 = scalar_lea.vmem [#allocation8], %s1142
          %1144 = dma.done %s1141, 16
        $region68: #{tpu_custom_call.1} parent=63 // pred_fallthru
          _
      $region64: #{tpu_custom_call.1} parent=5 // pred_fallthru
        _
    $region6: #{tpu_custom_call.1} parent=1 // loop_footer
      %s22 = sadd.s32 1, %s18
    $region7: #{tpu_custom_call.1} parent=1 // loop_footer_branch
      %17 = sbr.rel target = $region3
    $region8: #{tpu_custom_call.1} parent=1 // loop_exit
      _
    %1145 = vsyncpa [#allocation4], 1
    %s1146 = scalar_lea.sflag [#allocation4], 1
    %1147 = vsyncpa %s1146, 1
    %1148 = vsyncpa [#allocation7], 1
    %1149 = vsyncpa [#allocation5], 1
    %s1150 = scalar_lea.sflag [#allocation5], 1
    %1151 = vsyncpa %s1150, 1

</llo_original>
